<compile_context>
chip_gen: v5e
topology: v5e:2x2
jax: 0.10.0
libtpu: 0.0.40
codegen_flags: <defaults>
</compile_context>

<pallas_src>
import functools

import jax
import jax.numpy as jnp
import numpy as np
from jax import lax
from jax.experimental import pallas as pl
from jax.experimental.pallas import tpu as pltpu


def _round_up(x, m):
    return ((x + m - 1) // m) * m


# ------------------------ fused-conv Pallas kernel --------------------------

def _precm_conv_kernel(x_ref, w_ref, o_ref, slab_ref, *, C, k, d, Wp, M, Bs):
    """One grid step = Bs batch elements, one stacked MXU matmul.

    x_ref:    (Bs, C, L_in)   row-flattened, zero-padded input
    w_ref:    (N, K)          weights, columns ordered (kh, kw, c), K = k*k*C
    o_ref:    (Bs, N, M)      stride-1 "full-width" conv output, lane-dense
    slab_ref: (K, Bs*M)       VMEM scratch: im2col slab built from lane shifts
    """
    # Build the stacked slab: row block (kh*k + kw)*C .. +C holds the input
    # shifted by the (kh, kw) tap; batch element b occupies lane block
    # [b*M, (b+1)*M)  (M is a multiple of 128, so slab writes are lane-aligned).
    for b in range(Bs):
        xb = x_ref[b]                                      # (C, L_in)
        for kh in range(k):
            for kw in range(k):
                off = d * (kh * Wp + kw)                   # static lane offset
                idx = kh * k + kw
                slab_ref[idx * C:(idx + 1) * C, b * M:(b + 1) * M] = \
                    xb[:, off:off + M]
    # Single (N, K) @ (K, Bs*M) matmul with f32 accumulation on the MXU.
    res = jnp.dot(w_ref[...], slab_ref[...],
                  preferred_element_type=jnp.float32)      # (N, Bs*M)
    for b in range(Bs):
        o_ref[b] = res[:, b * M:(b + 1) * M]               # lane-aligned stores


# ------------------------------ PreCM2 module -------------------------------

class PreCM2:
    def __init__(self, in_channels, out_channels, kernel_size, stride, bias,
                 dilation=1, groups=1, key=None):
        self.in_channels = in_channels
        self.out_channels = out_channels
        self.kernel_size = kernel_size
        self.stride = stride
        self.dilation = dilation
        self.groups = groups
        self.bias = bias  # accepted but unused, same as the torch forward
        if key is None:
            key = jax.random.PRNGKey(42)
        # weight0: (4*out_channels, in_channels//groups, k, k), deterministic init.
        self.weight0 = 0.1 * jax.random.normal(
            key,
            (4 * out_channels, in_channels // groups, kernel_size, kernel_size),
            dtype=jnp.float32)
        # Pre-flattened weight for the kernel, built once (not per forward):
        # (N, C, kh, kw) -> (N, kh, kw, C) -> (N, k*k*C); column order matches
        # the slab rows built inside the kernel.
        N = 4 * out_channels
        K = (in_channels // groups) * kernel_size * kernel_size
        self._w2 = jnp.transpose(self.weight0, (0, 2, 3, 1)).reshape(N, K)
        # `self.convtest` in the PyTorch module is never used in forward — omitted.

    # ---- conv via fused im2col-matmul inside one Pallas kernel ----
    def _conv(self, x_pad):
        B, C, Hp, Wp = x_pad.shape
        k, s, d = self.kernel_size, self.stride, self.dilation
        N = 4 * self.out_channels
        K = C * k * k

        Ho_full = Hp - d * (k - 1)          # stride-1 output height
        Wo_full = Wp - d * (k - 1)          # stride-1 output width
        M_valid = Ho_full * Wp              # full-width rows (junk cols >= Wo_full)
        M_lane = _round_up(M_valid, 128)    # lane-dense output width
        max_off = d * ((k - 1) * Wp + (k - 1))
        L_in = _round_up(M_lane + max_off, 128)

        # Row-flatten and zero-pad the lane dim so every shifted slice is in-bounds.
        x_flat = x_pad.reshape(B, C, Hp * Wp)
        x_flat = jnp.pad(x_flat, ((0, 0), (0, 0), (0, L_in - Hp * Wp)))

        # Two grid steps = one per v7x TensorCore; on v5e/v6e the extra step is
        # only one more (cheap) serial iteration instead of B of them.
        G = 2 if (B % 2 == 0 and B >= 2) else 1
        Bs = B // G

        kernel = functools.partial(_precm_conv_kernel,
                                   C=C, k=k, d=d, Wp=Wp, M=M_lane, Bs=Bs)
        out_flat = pl.pallas_call(
            kernel,
            out_shape=jax.ShapeDtypeStruct((B, N, M_lane), jnp.float32),
            grid_spec=pltpu.PrefetchScalarGridSpec(
                num_scalar_prefetch=0,
                grid=(G,),
                in_specs=[
                    pl.BlockSpec((Bs, C, L_in), lambda g: (g, 0, 0)),
                    pl.BlockSpec((N, K), lambda g: (0, 0)),
                ],
                out_specs=pl.BlockSpec((Bs, N, M_lane), lambda g: (g, 0, 0)),
                scratch_shapes=[pltpu.VMEM((K, Bs * M_lane), jnp.float32)],
            ),
            compiler_params=pltpu.CompilerParams(
                dimension_semantics=("parallel",),
                vmem_limit_bytes=32 * 1024 * 1024,
            ),
        )(x_flat, self._w2)

        # Drop junk columns / padding, then apply the stride by subsampling.
        out_full = out_flat[:, :, :M_valid].reshape(B, N, Ho_full, Wp)
        out_full = out_full[:, :, :, :Wo_full]
        # TODO(synk): for stride > 1, bake the stride into the kernel's output
        # column map instead of computing the full stride-1 conv and subsampling.
        return out_full[:, :, ::s, ::s]                 # (B, 4*oc, Ho, Wo) NCHW

    def __call__(self, x, output_shape):
        ho, wo = output_shape[0], output_shape[1]
        b, c, h, w = x.shape
        k, s, d = self.kernel_size, self.stride, self.dilation

        # Padding identical to the torch code (F.pad ordering preserved):
        # F.pad(input, (p_a, p_b, p_l, p_r)): width gets (p_a, p_b), height (p_l, p_r).
        pab = (ho - 1) * s + d * (k - 1) + 1 - h
        prl = (wo - 1) * s + d * (k - 1) + 1 - w
        p_b = pab // 2
        p_l = prl // 2
        p_a = pab - p_b
        p_r = prl - p_l
        # lax.pad supports negative padding (crop), matching F.pad semantics.
        x_pad = lax.pad(x, jnp.array(0.0, x.dtype),
                        ((0, 0, 0), (0, 0, 0), (p_l, p_r, 0), (p_a, p_b, 0)))

        # TODO(synk): groups > 1 would split the matmul per group; only groups=1 here.
        out2 = self._conv(x_pad)                        # (b, 4*oc, ho, wo)

        # Vectorized epilogue: result[i] = sum_r rot90(out2[jb=(i+r)%4, cb=(-r)%4], k=r)
        # (requires ho == wo for the mixed-rotation sum, same as the torch code).
        batch = b // 4
        oc = self.out_channels
        x6 = out2.reshape(4, batch, 4, oc, ho, wo)      # (batch-blk, batch, ch-blk, oc, h, w)
        res = None
        for r in range(4):
            piece = x6[:, :, (-r) % 4]                  # (4, batch, oc, ho, wo)
            piece = jnp.roll(piece, shift=-r, axis=0)
            piece = jnp.rot90(piece, k=r, axes=(3, 4))
            res = piece if res is None else res + piece
        return res.reshape(4 * batch, oc, ho, wo)


# ---------------------------- pure-JAX reference -----------------------------

def reference_forward(module: PreCM2, x, output_shape):
    ho, wo = output_shape
    b, c, h, w = x.shape
    k, s, d = module.kernel_size, module.stride, module.dilation
    pab = (ho - 1) * s + d * (k - 1) + 1 - h
    prl = (wo - 1) * s + d * (k - 1) + 1 - w
    p_b = pab // 2
    p_l = prl // 2
    p_a = pab - p_b
    p_r = prl - p_l
    x_pad = lax.pad(x, jnp.array(0.0, x.dtype),
                    ((0, 0, 0), (0, 0, 0), (p_l, p_r, 0), (p_a, p_b, 0)))
    out2 = lax.conv_general_dilated(
        x_pad, module.weight0,
        window_strides=(s, s), padding="VALID",
        rhs_dilation=(d, d),
        dimension_numbers=("NCHW", "OIHW", "NCHW"),
        feature_group_count=module.groups)
    batch = b // 4
    oc = module.out_channels
    pieces = []
    for i in range(4):
        acc = None
        for j in range(4):
            blk = out2[j * batch:(j + 1) * batch,
                       ((i - j) % 4) * oc:((i - j) % 4) * oc + oc, :, :]
            r = jnp.rot90(blk, k=(-i + j) % 4, axes=(2, 3))
            acc = r if acc is None else acc + r
        pieces.append(acc)
    return jnp.concatenate(pieces, axis=0)


# ------------------------------------ main -----------------------------------

if __name__ == "__main__":
    key = jax.random.PRNGKey(0)
    k_x, k_w = jax.random.split(key)

    in_channels, out_channels = 4, 4
    kernel_size, stride = 3, 1
    B, H, W = 4, 16, 16            # B must be divisible by 4 (torch forward requires it)
    out_hw = [16, 16]              # square so rot90(k=1,3) shapes line up

    x = jax.random.normal(k_x, (B, in_channels, H, W), dtype=jnp.float32)

    module = PreCM2(in_channels, out_channels, kernel_size, stride, bias=0,
                    dilation=1, groups=1, key=k_w)

    fwd = jax.jit(functools.partial(module, output_shape=out_hw))
    y = jax.block_until_ready(fwd(x))

    y_ref = jax.block_until_ready(reference_forward(module, x, out_hw))

    assert y.shape == (B, out_channels, out_hw[0], out_hw[1]), y.shape
    np.testing.assert_allclose(np.asarray(y), np.asarray(y_ref),
                               rtol=1e-3, atol=1e-3)
    print("KERNEL_OK")
</pallas_src>

<mosaic_0001>
module attributes {stable_mosaic.version = 11 : i64} {
  func.func @_precm_conv_kernel(%arg0: i32, %arg1: memref<2x4x512xf32, #tpu.memory_space<vmem>>, %arg2: memref<16x36xf32, #tpu.memory_space<vmem>>, %arg3: memref<2x16x384xf32, #tpu.memory_space<vmem>>, %arg4: memref<36x768xf32, #tpu.memory_space<vmem>>) attributes {dimension_semantics = [#tpu.dimension_semantics<parallel>], iteration_bounds = array<i64: 2>, scalar_prefetch = 0 : i64, scratch_operands = 1 : i64, tpu.core_type = #tpu.core_type<tc>, window_params = [{transform_indices = @transform_0, window_bounds = array<i64: 2, 4, 512>}, {pipeline_mode = #tpu.pipeline_mode<synchronous>, transform_indices = @transform_1, window_bounds = array<i64: 16, 36>}, {transform_indices = @transform_2, window_bounds = array<i64: 2, 16, 384>}]} {
    %c0 = arith.constant 0 : index
    %c0_0 = arith.constant 0 : index
    %c0_1 = arith.constant 0 : index
    %0 = vector.load %arg1[%c0, %c0_0, %c0_1] : memref<2x4x512xf32, #tpu.memory_space<vmem>>, vector<1x4x512xf32>
    %1 = vector.shape_cast %0 : vector<1x4x512xf32> to vector<4x512xf32>
    %2 = vector.extract_strided_slice %1 {offsets = [0, 0], sizes = [4, 384], strides = [1, 1]} : vector<4x512xf32> to vector<4x384xf32>
    %c0_2 = arith.constant 0 : index
    %c0_3 = arith.constant 0 : index
    %3 = vector.load %arg4[%c0_2, %c0_3] : memref<36x768xf32, #tpu.memory_space<vmem>>, vector<4x384xf32>
    tpu.vector_store %arg4[%c0_2, %c0_3], %2 {strides = array<i32>} : memref<36x768xf32, #tpu.memory_space<vmem>>, vector<4x384xf32>,
    %4 = vector.extract_strided_slice %1 {offsets = [0, 1], sizes = [4, 384], strides = [1, 1]} : vector<4x512xf32> to vector<4x384xf32>
    %c4 = arith.constant 4 : index
    %c0_4 = arith.constant 0 : index
    %5 = vector.load %arg4[%c4, %c0_4] : memref<36x768xf32, #tpu.memory_space<vmem>>, vector<4x384xf32>
    tpu.vector_store %arg4[%c4, %c0_4], %4 {strides = array<i32>} : memref<36x768xf32, #tpu.memory_space<vmem>>, vector<4x384xf32>,
    %6 = vector.extract_strided_slice %1 {offsets = [0, 2], sizes = [4, 384], strides = [1, 1]} : vector<4x512xf32> to vector<4x384xf32>
    %c8 = arith.constant 8 : index
    %c0_5 = arith.constant 0 : index
    %7 = vector.load %arg4[%c8, %c0_5] : memref<36x768xf32, #tpu.memory_space<vmem>>, vector<4x384xf32>
    tpu.vector_store %arg4[%c8, %c0_5], %6 {strides = array<i32>} : memref<36x768xf32, #tpu.memory_space<vmem>>, vector<4x384xf32>,
    %8 = vector.extract_strided_slice %1 {offsets = [0, 18], sizes = [4, 384], strides = [1, 1]} : vector<4x512xf32> to vector<4x384xf32>
    %c12 = arith.constant 12 : index
    %c0_6 = arith.constant 0 : index
    %9 = vector.load %arg4[%c12, %c0_6] : memref<36x768xf32, #tpu.memory_space<vmem>>, vector<4x384xf32>
    tpu.vector_store %arg4[%c12, %c0_6], %8 {strides = array<i32>} : memref<36x768xf32, #tpu.memory_space<vmem>>, vector<4x384xf32>,
    %10 = vector.extract_strided_slice %1 {offsets = [0, 19], sizes = [4, 384], strides = [1, 1]} : vector<4x512xf32> to vector<4x384xf32>
    %c16 = arith.constant 16 : index
    %c0_7 = arith.constant 0 : index
    %11 = vector.load %arg4[%c16, %c0_7] : memref<36x768xf32, #tpu.memory_space<vmem>>, vector<4x384xf32>
    tpu.vector_store %arg4[%c16, %c0_7], %10 {strides = array<i32>} : memref<36x768xf32, #tpu.memory_space<vmem>>, vector<4x384xf32>,
    %12 = vector.extract_strided_slice %1 {offsets = [0, 20], sizes = [4, 384], strides = [1, 1]} : vector<4x512xf32> to vector<4x384xf32>
    %c20 = arith.constant 20 : index
    %c0_8 = arith.constant 0 : index
    %13 = vector.load %arg4[%c20, %c0_8] : memref<36x768xf32, #tpu.memory_space<vmem>>, vector<4x384xf32>
    tpu.vector_store %arg4[%c20, %c0_8], %12 {strides = array<i32>} : memref<36x768xf32, #tpu.memory_space<vmem>>, vector<4x384xf32>,
    %14 = vector.extract_strided_slice %1 {offsets = [0, 36], sizes = [4, 384], strides = [1, 1]} : vector<4x512xf32> to vector<4x384xf32>
    %c24 = arith.constant 24 : index
    %c0_9 = arith.constant 0 : index
    %15 = vector.load %arg4[%c24, %c0_9] : memref<36x768xf32, #tpu.memory_space<vmem>>, vector<4x384xf32>
    tpu.vector_store %arg4[%c24, %c0_9], %14 {strides = array<i32>} : memref<36x768xf32, #tpu.memory_space<vmem>>, vector<4x384xf32>,
    %16 = vector.extract_strided_slice %1 {offsets = [0, 37], sizes = [4, 384], strides = [1, 1]} : vector<4x512xf32> to vector<4x384xf32>
    %c28 = arith.constant 28 : index
    %c0_10 = arith.constant 0 : index
    %17 = vector.load %arg4[%c28, %c0_10] : memref<36x768xf32, #tpu.memory_space<vmem>>, vector<4x384xf32>
    tpu.vector_store %arg4[%c28, %c0_10], %16 {strides = array<i32>} : memref<36x768xf32, #tpu.memory_space<vmem>>, vector<4x384xf32>,
    %18 = vector.extract_strided_slice %1 {offsets = [0, 38], sizes = [4, 384], strides = [1, 1]} : vector<4x512xf32> to vector<4x384xf32>
    %c32 = arith.constant 32 : index
    %c0_11 = arith.constant 0 : index
    %19 = vector.load %arg4[%c32, %c0_11] : memref<36x768xf32, #tpu.memory_space<vmem>>, vector<4x384xf32>
    tpu.vector_store %arg4[%c32, %c0_11], %18 {strides = array<i32>} : memref<36x768xf32, #tpu.memory_space<vmem>>, vector<4x384xf32>,
    %c1 = arith.constant 1 : index
    %c0_12 = arith.constant 0 : index
    %c0_13 = arith.constant 0 : index
    %20 = vector.load %arg1[%c1, %c0_12, %c0_13] : memref<2x4x512xf32, #tpu.memory_space<vmem>>, vector<1x4x512xf32>
    %21 = vector.shape_cast %20 : vector<1x4x512xf32> to vector<4x512xf32>
    %22 = vector.extract_strided_slice %21 {offsets = [0, 0], sizes = [4, 384], strides = [1, 1]} : vector<4x512xf32> to vector<4x384xf32>
    %c0_14 = arith.constant 0 : index
    %c384 = arith.constant 384 : index
    %23 = vector.load %arg4[%c0_14, %c384] : memref<36x768xf32, #tpu.memory_space<vmem>>, vector<4x384xf32>
    tpu.vector_store %arg4[%c0_14, %c384], %22 {strides = array<i32>} : memref<36x768xf32, #tpu.memory_space<vmem>>, vector<4x384xf32>,
    %24 = vector.extract_strided_slice %21 {offsets = [0, 1], sizes = [4, 384], strides = [1, 1]} : vector<4x512xf32> to vector<4x384xf32>
    %c4_15 = arith.constant 4 : index
    %c384_16 = arith.constant 384 : index
    %25 = vector.load %arg4[%c4_15, %c384_16] : memref<36x768xf32, #tpu.memory_space<vmem>>, vector<4x384xf32>
    tpu.vector_store %arg4[%c4_15, %c384_16], %24 {strides = array<i32>} : memref<36x768xf32, #tpu.memory_space<vmem>>, vector<4x384xf32>,
    %26 = vector.extract_strided_slice %21 {offsets = [0, 2], sizes = [4, 384], strides = [1, 1]} : vector<4x512xf32> to vector<4x384xf32>
    %c8_17 = arith.constant 8 : index
    %c384_18 = arith.constant 384 : index
    %27 = vector.load %arg4[%c8_17, %c384_18] : memref<36x768xf32, #tpu.memory_space<vmem>>, vector<4x384xf32>
    tpu.vector_store %arg4[%c8_17, %c384_18], %26 {strides = array<i32>} : memref<36x768xf32, #tpu.memory_space<vmem>>, vector<4x384xf32>,
    %28 = vector.extract_strided_slice %21 {offsets = [0, 18], sizes = [4, 384], strides = [1, 1]} : vector<4x512xf32> to vector<4x384xf32>
    %c12_19 = arith.constant 12 : index
    %c384_20 = arith.constant 384 : index
    %29 = vector.load %arg4[%c12_19, %c384_20] : memref<36x768xf32, #tpu.memory_space<vmem>>, vector<4x384xf32>
    tpu.vector_store %arg4[%c12_19, %c384_20], %28 {strides = array<i32>} : memref<36x768xf32, #tpu.memory_space<vmem>>, vector<4x384xf32>,
    %30 = vector.extract_strided_slice %21 {offsets = [0, 19], sizes = [4, 384], strides = [1, 1]} : vector<4x512xf32> to vector<4x384xf32>
    %c16_21 = arith.constant 16 : index
    %c384_22 = arith.constant 384 : index
    %31 = vector.load %arg4[%c16_21, %c384_22] : memref<36x768xf32, #tpu.memory_space<vmem>>, vector<4x384xf32>
    tpu.vector_store %arg4[%c16_21, %c384_22], %30 {strides = array<i32>} : memref<36x768xf32, #tpu.memory_space<vmem>>, vector<4x384xf32>,
    %32 = vector.extract_strided_slice %21 {offsets = [0, 20], sizes = [4, 384], strides = [1, 1]} : vector<4x512xf32> to vector<4x384xf32>
    %c20_23 = arith.constant 20 : index
    %c384_24 = arith.constant 384 : index
    %33 = vector.load %arg4[%c20_23, %c384_24] : memref<36x768xf32, #tpu.memory_space<vmem>>, vector<4x384xf32>
    tpu.vector_store %arg4[%c20_23, %c384_24], %32 {strides = array<i32>} : memref<36x768xf32, #tpu.memory_space<vmem>>, vector<4x384xf32>,
    %34 = vector.extract_strided_slice %21 {offsets = [0, 36], sizes = [4, 384], strides = [1, 1]} : vector<4x512xf32> to vector<4x384xf32>
    %c24_25 = arith.constant 24 : index
    %c384_26 = arith.constant 384 : index
    %35 = vector.load %arg4[%c24_25, %c384_26] : memref<36x768xf32, #tpu.memory_space<vmem>>, vector<4x384xf32>
    tpu.vector_store %arg4[%c24_25, %c384_26], %34 {strides = array<i32>} : memref<36x768xf32, #tpu.memory_space<vmem>>, vector<4x384xf32>,
    %36 = vector.extract_strided_slice %21 {offsets = [0, 37], sizes = [4, 384], strides = [1, 1]} : vector<4x512xf32> to vector<4x384xf32>
    %c28_27 = arith.constant 28 : index
    %c384_28 = arith.constant 384 : index
    %37 = vector.load %arg4[%c28_27, %c384_28] : memref<36x768xf32, #tpu.memory_space<vmem>>, vector<4x384xf32>
    tpu.vector_store %arg4[%c28_27, %c384_28], %36 {strides = array<i32>} : memref<36x768xf32, #tpu.memory_space<vmem>>, vector<4x384xf32>,
    %38 = vector.extract_strided_slice %21 {offsets = [0, 38], sizes = [4, 384], strides = [1, 1]} : vector<4x512xf32> to vector<4x384xf32>
    %c32_29 = arith.constant 32 : index
    %c384_30 = arith.constant 384 : index
    %39 = vector.load %arg4[%c32_29, %c384_30] : memref<36x768xf32, #tpu.memory_space<vmem>>, vector<4x384xf32>
    tpu.vector_store %arg4[%c32_29, %c384_30], %38 {strides = array<i32>} : memref<36x768xf32, #tpu.memory_space<vmem>>, vector<4x384xf32>,
    %c0_31 = arith.constant 0 : index
    %c0_32 = arith.constant 0 : index
    %40 = vector.load %arg2[%c0_31, %c0_32] : memref<16x36xf32, #tpu.memory_space<vmem>>, vector<16x36xf32>
    %c0_33 = arith.constant 0 : index
    %c0_34 = arith.constant 0 : index
    %41 = vector.load %arg4[%c0_33, %c0_34] : memref<36x768xf32, #tpu.memory_space<vmem>>, vector<36x768xf32>
    %cst = arith.constant dense<0.000000e+00> : vector<16x768xf32>
    %42 = tpu.matmul %40, %41, %cst {dimension_numbers = #tpu.dot_dimension_numbers<[1], [0], [0], [1], [0, 0, 1, 1], [], []>} : vector<16x36xf32>, vector<36x768xf32>, vector<16x768xf32> -> vector<16x768xf32>
    %43 = vector.extract_strided_slice %42 {offsets = [0, 0], sizes = [16, 384], strides = [1, 1]} : vector<16x768xf32> to vector<16x384xf32>
    %c0_35 = arith.constant 0 : index
    %c0_36 = arith.constant 0 : index
    %c0_37 = arith.constant 0 : index
    %44 = vector.load %arg3[%c0_35, %c0_36, %c0_37] : memref<2x16x384xf32, #tpu.memory_space<vmem>>, vector<1x16x384xf32>
    %45 = vector.shape_cast %44 : vector<1x16x384xf32> to vector<16x384xf32>
    %46 = vector.shape_cast %43 : vector<16x384xf32> to vector<1x16x384xf32>
    tpu.vector_store %arg3[%c0_35, %c0_36, %c0_37], %46 {strides = array<i32>} : memref<2x16x384xf32, #tpu.memory_space<vmem>>, vector<1x16x384xf32>,
    %47 = vector.extract_strided_slice %42 {offsets = [0, 384], sizes = [16, 384], strides = [1, 1]} : vector<16x768xf32> to vector<16x384xf32>
    %c1_38 = arith.constant 1 : index
    %c0_39 = arith.constant 0 : index
    %c0_40 = arith.constant 0 : index
    %48 = vector.load %arg3[%c1_38, %c0_39, %c0_40] : memref<2x16x384xf32, #tpu.memory_space<vmem>>, vector<1x16x384xf32>
    %49 = vector.shape_cast %48 : vector<1x16x384xf32> to vector<16x384xf32>
    %50 = vector.shape_cast %47 : vector<16x384xf32> to vector<1x16x384xf32>
    tpu.vector_store %arg3[%c1_38, %c0_39, %c0_40], %50 {strides = array<i32>} : memref<2x16x384xf32, #tpu.memory_space<vmem>>, vector<1x16x384xf32>,
    return
  }
  func.func @transform_0(%arg0: i32) -> (i32, i32, i32) {
    %c0_i32 = arith.constant 0 : i32
    %c0_i32_0 = arith.constant 0 : i32
    %c0_i32_1 = arith.constant 0 : i32
    return %arg0, %c0_i32, %c0_i32_0 : i32, i32, i32
  }
  func.func @transform_1(%arg0: i32) -> (i32, i32) {
    %c0_i32 = arith.constant 0 : i32
    %c0_i32_0 = arith.constant 0 : i32
    %c0_i32_1 = arith.constant 0 : i32
    return %c0_i32, %c0_i32_0 : i32, i32
  }
  func.func @transform_2(%arg0: i32) -> (i32, i32, i32) {
    %c0_i32 = arith.constant 0 : i32
    %c0_i32_0 = arith.constant 0 : i32
    %c0_i32_1 = arith.constant 0 : i32
    return %arg0, %c0_i32, %c0_i32_0 : i32, i32, i32
  }
}

</mosaic_0001>

<llo_original>
// kernel: _unnamed_function_.1
$region0: #{_unnamed_function_.1}
  #allocation0 [shape = 'u32[]', space=smem, size = 0x4, offset = 0x4, fixed_abs, tag = 'smem constant byte address 0x4 - core index']
  #allocation1 [shape = 'u32[72,128]{1,0:T(1,128)}', space=vmem, size = 0x9000, scoped, tag = 'internal scratch']
  #allocation2 [shape = 'f32[36,768]{1,0:T(8,128)}', space=vmem, size = 0x1e000, scoped, tag = 'scratch operand']
  %s0 = inlined_call_operand.vmem [shape: f32[4,4,512], index: 0, kind: input, shape index: {}]
  %s1 = inlined_call_operand.vmem [shape: f32[16,36], index: 1, kind: input, shape index: {}]
  %s2 = inlined_call_operand.vmem [shape: f32[4,16,384], index: 2, kind: output, shape index: {}]
  %s3 = sld [smem:[#allocation0]]
  $region41: #{_unnamed_function_.1} parent=0
    _
  %s5 = ssub.s32 1, %s3
  %s6 = scalar_select 0, %s5, %s3
  loop: start=0, step=1, limit=4
  $region2: #{_unnamed_function_.1} parent=0 // loop_pre_header
    _
  $region3: #{_unnamed_function_.1} parent=0 // loop_header
    %s8 = sphi 0, %s12
    %p9 = scmp.ge.s32.totalorder %s8, 4
    %s18 = sphi 0, %s20
    %s21 = sphi 0, %s18
    %s22 = sphi 0, %s21
    %s38 = sphi 0, %s22
    %s42 = sphi 0, %s42
    %s44 = sphi 0, %s42
    %s45 = sphi 0, %s44
    %s59 = sphi 0, %s45
    %s65 = sphi 0, %s67
    %s68 = sphi 0, %s65
    %s69 = sphi 0, %s68
    %s85 = sphi 0, %s69
  $region4: #{_unnamed_function_.1} parent=0 // loop_header_branch
    %11 = sbr.rel (%p9) target = $region8
  $region5: #{_unnamed_function_.1} parent=0 // loop_body
    %s13 = ssub.s32 %s8, 1
    %s14 = ssub.s32 %s8, 2
    %s15 = sadd.s32 %s8, 1
    %s16 = ssub.s32 %s8, %s15
    %p17 = scmp.eq.s32.totalorder %s16, 0
    %s19 = sadd.s32 %s18, 1
    %s20 = scalar_select %p17, %s18, %s19
    %p23 = pneg %p17
    %p24 = scmp.eq.s32.totalorder %s8, 1
    %p25 = por %p23, %p24
    %p26 = scmp.ne.s32.totalorder %s18, %s21
    %p27 = scmp.eq.s32.totalorder %s8, 0
    %p28 = por %p26, %p27
    %p29 = scmp.ne.s32.totalorder %s18, %s21
    %p30 = scmp.eq.s32.totalorder %s13, 1
    %p31 = por %p29, %p30
    %p32 = scmp.ne.s32.totalorder %s21, %s22
    %p33 = scmp.eq.s32.totalorder %s13, 0
    %p34 = por %p32, %p33
    %p35 = scmp.ne.s32.totalorder %s21, %s22
    %p36 = scmp.eq.s32.totalorder %s14, 1
    %p37 = por %p35, %p36
    %p39 = scmp.ne.s32.totalorder %s22, %s38
    %p40 = scmp.eq.s32.totalorder %s14, 0
    %p41 = por %p39, %p40
    %s43 = sadd.s32 %s42, 1
    %p46 = scmp.eq.s32.totalorder %s8, 1
    %p47 = scmp.ne.s32.totalorder %s42, %s44
    %p48 = scmp.eq.s32.totalorder %s8, 0
    %p49 = por %p47, %p48
    %p50 = scmp.ne.s32.totalorder %s42, %s44
    %p51 = scmp.eq.s32.totalorder %s13, 1
    %p52 = por %p50, %p51
    %p53 = scmp.ne.s32.totalorder %s44, %s45
    %p54 = scmp.eq.s32.totalorder %s13, 0
    %p55 = por %p53, %p54
    %p56 = scmp.ne.s32.totalorder %s44, %s45
    %p57 = scmp.eq.s32.totalorder %s14, 1
    %p58 = por %p56, %p57
    %p60 = scmp.ne.s32.totalorder %s45, %s59
    %p61 = scmp.eq.s32.totalorder %s14, 0
    %p62 = por %p60, %p61
    %s63 = ssub.s32 %s8, %s15
    %p64 = scmp.eq.s32.totalorder %s63, 0
    %s66 = sadd.s32 %s65, 1
    %s67 = scalar_select %p64, %s65, %s66
    %p70 = pneg %p64
    %p71 = scmp.eq.s32.totalorder %s8, 1
    %p72 = por %p70, %p71
    %p73 = scmp.ne.s32.totalorder %s65, %s68
    %p74 = scmp.eq.s32.totalorder %s8, 0
    %p75 = por %p73, %p74
    %p76 = scmp.ne.s32.totalorder %s65, %s68
    %p77 = scmp.eq.s32.totalorder %s13, 1
    %p78 = por %p76, %p77
    %p79 = scmp.ne.s32.totalorder %s68, %s69
    %p80 = scmp.eq.s32.totalorder %s13, 0
    %p81 = por %p79, %p80
    %p82 = scmp.ne.s32.totalorder %s68, %s69
    %p83 = scmp.eq.s32.totalorder %s14, 1
    %p84 = por %p82, %p83
    %p86 = scmp.ne.s32.totalorder %s69, %s85
    %p87 = scmp.eq.s32.totalorder %s14, 0
    %p88 = por %p86, %p87
    %p89 = scmp.le.s32.totalorder 1, %s8
    %p90 = scmp.lt.s32.totalorder %s8, 3
    %p91 = pnand %p89, %p90
    %p92 = pneg %p91
    // Predicated region
    $region9: #{_unnamed_function_.1} parent=5 // pred_check
      _
    $region10: #{_unnamed_function_.1} parent=5 // pred_check_branch
      %94 = sbr.rel (%p91) target = $region12
    $region11: #{_unnamed_function_.1} parent=5 // pred_region
      %s95 = ssub.s32 %s8, 1
      // Predicated region
      $region13: #{_unnamed_function_.1} parent=11 // pred_check
        %p96 = pneg %p55
      $region14: #{_unnamed_function_.1} parent=11 // pred_check_branch
        %98 = sbr.rel (%p96) target = $region16
      $region15: #{_unnamed_function_.1} parent=11 // pred_region
        _
      $region16: #{_unnamed_function_.1} parent=11 // pred_fallthru
        _
    $region12: #{_unnamed_function_.1} parent=5 // pred_fallthru
      _
    %p99 = scmp.lt.s32.totalorder %s8, 2
    // Predicated region
    $region17: #{_unnamed_function_.1} parent=5 // pred_check
      %p100 = pneg %p99
    $region18: #{_unnamed_function_.1} parent=5 // pred_check_branch
      %102 = sbr.rel (%p100) target = $region20
    $region19: #{_unnamed_function_.1} parent=5 // pred_region
      // Predicated region
      $region21: #{_unnamed_function_.1} parent=19 // pred_check
        %p103 = pneg %p28
      $region22: #{_unnamed_function_.1} parent=19 // pred_check_branch
        %105 = sbr.rel (%p103) target = $region24
      $region23: #{_unnamed_function_.1} parent=19 // pred_region
        %s106 = smul.u32 2, %s8
        %p107 = scmp.lt.s32.totalorder %s106, 3
        %s108 = scalar_select %p107, %s106, 3
        %s109 = smul.addr %s108, 4
        %s110 = smul.addr %s109, 4
        %s111 = scalar_lea.vmem %s0, %s110
        %s112 = smul.u32 2, %s8
      $region24: #{_unnamed_function_.1} parent=19 // pred_fallthru
        _
    $region20: #{_unnamed_function_.1} parent=5 // pred_fallthru
      _
    %p113 = scmp.le.s32.totalorder 1, %s8
    %p114 = scmp.lt.s32.totalorder %s8, 3
    %p115 = pnand %p113, %p114
    %p116 = pneg %p115
    // Predicated region
    $region25: #{_unnamed_function_.1} parent=5 // pred_check
      _
    $region26: #{_unnamed_function_.1} parent=5 // pred_check_branch
      %118 = sbr.rel (%p115) target = $region28
    $region27: #{_unnamed_function_.1} parent=5 // pred_region
      %s119 = ssub.s32 %s8, 1
      %s120 = smul.u32 2, %s13
      %p121 = scmp.lt.s32.totalorder %s120, 3
      %s122 = scalar_select %p121, %s120, 3
      %s123 = smul.addr %s122, 4
      %s124 = smul.addr %s123, 4
      %s125 = scalar_lea.vmem %s0, %s124
      %p126 = pneg %p34
      %p127 = pneg %p31
      %p128 = pneg %p55
      %p129 = pneg %p52
      %p130 = pneg %p81
      %p131 = pneg %p78
      %s132 = smul.u32 2, %s13
      %p133 = scmp.lt.s32.totalorder %s132, 3
      %s134 = scalar_select %p133, %s132, 3
      %s135 = smul.addr %s134, 6
      %s136 = smul.addr %s135, 8
      %s137 = scalar_lea.vmem %s2, %s136
      %s138 = smul.u32 2, %s13
      %p139 = scmp.lt.s32.totalorder %s138, 3
      %s140 = scalar_select %p139, %s138, 3
      %s141 = smul.addr %s140, 4
      %s142 = smul.addr %s141, 4
      %s143 = scalar_lea.vmem %s0, %s142
      %s144 = smul.u32 2, %s13
      %s145 = smul.u32 2, %s13
      %p146 = scmp.lt.s32.totalorder %s145, 3
      %s147 = scalar_select %p146, %s145, 3
      %s148 = smul.addr %s147, 6
      %s149 = smul.addr %s148, 8
      %s150 = scalar_lea.vmem %s2, %s149
      %s151 = smul.u32 2, %s13
      %v152 = vld [vmem:[%s143] sm:$0xff]
      %v153 = vld [vmem:[%s143 + $0x8] sm:$0xff]
      %156 = vst [vmem:[#allocation1] ss:$2 sm:$0xff] %v152
      %s157 = scalar_lea.vmem [#allocation1], 16
      %158 = vst [vmem:[%s157] ss:$2 sm:$0xff] %v153
      %v159 = vld.sshfl [vmem:[#allocation1] sm:$0xff pattern:$0x75316420]
      %v160 = vld.sshfl [vmem:[#allocation1 + $0x8] sm:$0xff pattern:$0x75316420]
      %v161 = vld.sshfl [vmem:[#allocation1 + $0x10] sm:$0xff pattern:$0x75316420]
      %165 = vst [vmem:[#allocation2] sm:$0xf] %v159
      %166 = vst [vmem:[#allocation2 + $0x8] sm:$0xf] %v160
      %167 = vst [vmem:[#allocation2 + $0x10] sm:$0xf] %v161
      %s168 = scalar_lea.vmem [#allocation1], 1
      %169 = vst [vmem:[%s168] ss:$2 sm:$0xff] %v152
      %s170 = scalar_lea.vmem [#allocation1], 17
      %171 = vst [vmem:[%s170] ss:$2 sm:$0xff] %v153
      %v172 = vld.sshfl [vmem:[#allocation1] sm:$0xff pattern:$0x75316420]
      %v173 = vld.sshfl [vmem:[#allocation1 + $0x8] sm:$0xff pattern:$0x75316420]
      %v174 = vld.sshfl [vmem:[#allocation1 + $0x10] sm:$0xff pattern:$0x75316420]
      %v175 = vld.sshfl [vmem:[#allocation1 + $0x18] sm:$0xff pattern:$0x75316420]
      %176 = vrot.lane.b32.xlu0 %v172, 127
      %v177 = vpop.permute.xlu0 %176
      %178 = vrot.lane.b32.xlu0 %v173, 127
      %v179 = vpop.permute.xlu0 %178
      %180 = vrot.lane.b32.xlu0 %v174, 127
      %v181 = vpop.permute.xlu0 %180
      %182 = vrot.lane.b32.xlu0 %v175, 127
      %v183 = vpop.permute.xlu0 %182
      %vm184 = vcmask 1039360
      %v185 = vsel %vm184, %v177, %v179
      %v186 = vsel %vm184, %v179, %v181
      %v187 = vsel %vm184, %v181, %v183
      %191 = vst [vmem:[#allocation2] sm:$0xf0] %v185
      %192 = vst [vmem:[#allocation2 + $0x8] sm:$0xf0] %v186
      %193 = vst [vmem:[#allocation2 + $0x10] sm:$0xf0] %v187
      %194 = vst [vmem:[#allocation1] ss:$2 sm:$0xff] %v152
      %s195 = scalar_lea.vmem [#allocation1], 16
      %196 = vst [vmem:[%s195] ss:$2 sm:$0xff] %v153
      %v197 = vld.sshfl [vmem:[#allocation1] sm:$0xff pattern:$0x75316420]
      %v198 = vld.sshfl [vmem:[#allocation1 + $0x8] sm:$0xff pattern:$0x75316420]
      %v199 = vld.sshfl [vmem:[#allocation1 + $0x10] sm:$0xff pattern:$0x75316420]
      %v200 = vld.sshfl [vmem:[#allocation1 + $0x18] sm:$0xff pattern:$0x75316420]
      %201 = vrot.lane.b32.xlu0 %v197, 126
      %v202 = vpop.permute.xlu0 %201
      %203 = vrot.lane.b32.xlu0 %v198, 126
      %v204 = vpop.permute.xlu0 %203
      %205 = vrot.lane.b32.xlu0 %v199, 126
      %v206 = vpop.permute.xlu0 %205
      %207 = vrot.lane.b32.xlu0 %v200, 126
      %v208 = vpop.permute.xlu0 %207
      %vm209 = vcmask 1031168
      %v210 = vsel %vm209, %v202, %v204
      %v211 = vsel %vm209, %v204, %v206
      %v212 = vsel %vm209, %v206, %v208
      %216 = vst [vmem:[#allocation2 + $0x30] sm:$0xf] %v210
      %217 = vst [vmem:[#allocation2 + $0x38] sm:$0xf] %v211
      %218 = vst [vmem:[#allocation2 + $0x40] sm:$0xf] %v212
      %s219 = scalar_lea.vmem [#allocation1], 1
      %220 = vst [vmem:[%s219] ss:$2 sm:$0xff] %v152
      %s221 = scalar_lea.vmem [#allocation1], 17
      %222 = vst [vmem:[%s221] ss:$2 sm:$0xff] %v153
      %v223 = vld.sshfl [vmem:[#allocation1] sm:$0xff pattern:$0x75316420]
      %v224 = vld.sshfl [vmem:[#allocation1 + $0x8] sm:$0xff pattern:$0x75316420]
      %v225 = vld.sshfl [vmem:[#allocation1 + $0x10] sm:$0xff pattern:$0x75316420]
      %v226 = vld.sshfl [vmem:[#allocation1 + $0x18] sm:$0xff pattern:$0x75316420]
      %227 = vrot.lane.b32.xlu0 %v223, 110
      %v228 = vpop.permute.xlu0 %227
      %229 = vrot.lane.b32.xlu0 %v224, 110
      %v230 = vpop.permute.xlu0 %229
      %231 = vrot.lane.b32.xlu0 %v225, 110
      %v232 = vpop.permute.xlu0 %231
      %233 = vrot.lane.b32.xlu0 %v226, 110
      %v234 = vpop.permute.xlu0 %233
      %vm235 = vcmask 900096
      %v236 = vsel %vm235, %v228, %v230
      %v237 = vsel %vm235, %v230, %v232
      %v238 = vsel %vm235, %v232, %v234
      %242 = vst [vmem:[#allocation2 + $0x30] sm:$0xf0] %v236
      %243 = vst [vmem:[#allocation2 + $0x38] sm:$0xf0] %v237
      %244 = vst [vmem:[#allocation2 + $0x40] sm:$0xf0] %v238
      %245 = vst [vmem:[#allocation1] ss:$2 sm:$0xff] %v152
      %s246 = scalar_lea.vmem [#allocation1], 16
      %247 = vst [vmem:[%s246] ss:$2 sm:$0xff] %v153
      %v248 = vld.sshfl [vmem:[#allocation1] sm:$0xff pattern:$0x75316420]
      %v249 = vld.sshfl [vmem:[#allocation1 + $0x8] sm:$0xff pattern:$0x75316420]
      %v250 = vld.sshfl [vmem:[#allocation1 + $0x10] sm:$0xff pattern:$0x75316420]
      %v251 = vld.sshfl [vmem:[#allocation1 + $0x18] sm:$0xff pattern:$0x75316420]
      %252 = vrot.lane.b32.xlu0 %v248, 109
      %v253 = vpop.permute.xlu0 %252
      %254 = vrot.lane.b32.xlu0 %v249, 109
      %v255 = vpop.permute.xlu0 %254
      %256 = vrot.lane.b32.xlu0 %v250, 109
      %v257 = vpop.permute.xlu0 %256
      %258 = vrot.lane.b32.xlu0 %v251, 109
      %v259 = vpop.permute.xlu0 %258
      %vm260 = vcmask 891904
      %v261 = vsel %vm260, %v253, %v255
      %v262 = vsel %vm260, %v255, %v257
      %v263 = vsel %vm260, %v257, %v259
      %267 = vst [vmem:[#allocation2 + $0x60] sm:$0xf] %v261
      %268 = vst [vmem:[#allocation2 + $0x68] sm:$0xf] %v262
      %269 = vst [vmem:[#allocation2 + $0x70] sm:$0xf] %v263
      %s270 = scalar_lea.vmem [#allocation1], 1
      %271 = vst [vmem:[%s270] ss:$2 sm:$0xff] %v152
      %s272 = scalar_lea.vmem [#allocation1], 17
      %273 = vst [vmem:[%s272] ss:$2 sm:$0xff] %v153
      %v274 = vld.sshfl [vmem:[#allocation1] sm:$0xff pattern:$0x75316420]
      %v275 = vld.sshfl [vmem:[#allocation1 + $0x8] sm:$0xff pattern:$0x75316420]
      %v276 = vld.sshfl [vmem:[#allocation1 + $0x10] sm:$0xff pattern:$0x75316420]
      %v277 = vld.sshfl [vmem:[#allocation1 + $0x18] sm:$0xff pattern:$0x75316420]
      %278 = vrot.lane.b32.xlu0 %v274, 108
      %v279 = vpop.permute.xlu0 %278
      %280 = vrot.lane.b32.xlu0 %v275, 108
      %v281 = vpop.permute.xlu0 %280
      %282 = vrot.lane.b32.xlu0 %v276, 108
      %v283 = vpop.permute.xlu0 %282
      %284 = vrot.lane.b32.xlu0 %v277, 108
      %v285 = vpop.permute.xlu0 %284
      %vm286 = vcmask 883712
      %v287 = vsel %vm286, %v279, %v281
      %v288 = vsel %vm286, %v281, %v283
      %v289 = vsel %vm286, %v283, %v285
      %293 = vst [vmem:[#allocation2 + $0x60] sm:$0xf0] %v287
      %294 = vst [vmem:[#allocation2 + $0x68] sm:$0xf0] %v288
      %295 = vst [vmem:[#allocation2 + $0x70] sm:$0xf0] %v289
      %296 = vst [vmem:[#allocation1] ss:$2 sm:$0xff] %v152
      %s297 = scalar_lea.vmem [#allocation1], 16
      %298 = vst [vmem:[%s297] ss:$2 sm:$0xff] %v153
      %v299 = vld.sshfl [vmem:[#allocation1] sm:$0xff pattern:$0x75316420]
      %v300 = vld.sshfl [vmem:[#allocation1 + $0x8] sm:$0xff pattern:$0x75316420]
      %v301 = vld.sshfl [vmem:[#allocation1 + $0x10] sm:$0xff pattern:$0x75316420]
      %v302 = vld.sshfl [vmem:[#allocation1 + $0x18] sm:$0xff pattern:$0x75316420]
      %303 = vrot.lane.b32.xlu0 %v299, 92
      %v304 = vpop.permute.xlu0 %303
      %305 = vrot.lane.b32.xlu0 %v300, 92
      %v306 = vpop.permute.xlu0 %305
      %307 = vrot.lane.b32.xlu0 %v301, 92
      %v308 = vpop.permute.xlu0 %307
      %309 = vrot.lane.b32.xlu0 %v302, 92
      %v310 = vpop.permute.xlu0 %309
      %vm311 = vcmask 752640
      %v312 = vsel %vm311, %v304, %v306
      %v313 = vsel %vm311, %v306, %v308
      %v314 = vsel %vm311, %v308, %v310
      %318 = vst [vmem:[#allocation2 + $0x90] sm:$0xf] %v312
      %319 = vst [vmem:[#allocation2 + $0x98] sm:$0xf] %v313
      %320 = vst [vmem:[#allocation2 + $0xa0] sm:$0xf] %v314
      %s321 = scalar_lea.vmem [#allocation1], 1
      %322 = vst [vmem:[%s321] ss:$2 sm:$0xff] %v152
      %s323 = scalar_lea.vmem [#allocation1], 17
      %324 = vst [vmem:[%s323] ss:$2 sm:$0xff] %v153
      %v325 = vld.sshfl [vmem:[#allocation1] sm:$0xff pattern:$0x75316420]
      %v326 = vld.sshfl [vmem:[#allocation1 + $0x8] sm:$0xff pattern:$0x75316420]
      %v327 = vld.sshfl [vmem:[#allocation1 + $0x10] sm:$0xff pattern:$0x75316420]
      %v328 = vld.sshfl [vmem:[#allocation1 + $0x18] sm:$0xff pattern:$0x75316420]
      %329 = vrot.lane.b32.xlu0 %v325, 91
      %v330 = vpop.permute.xlu0 %329
      %331 = vrot.lane.b32.xlu0 %v326, 91
      %v332 = vpop.permute.xlu0 %331
      %333 = vrot.lane.b32.xlu0 %v327, 91
      %v334 = vpop.permute.xlu0 %333
      %335 = vrot.lane.b32.xlu0 %v328, 91
      %v336 = vpop.permute.xlu0 %335
      %vm337 = vcmask 744448
      %v338 = vsel %vm337, %v330, %v332
      %v339 = vsel %vm337, %v332, %v334
      %v340 = vsel %vm337, %v334, %v336
      %344 = vst [vmem:[#allocation2 + $0x90] sm:$0xf0] %v338
      %345 = vst [vmem:[#allocation2 + $0x98] sm:$0xf0] %v339
      %346 = vst [vmem:[#allocation2 + $0xa0] sm:$0xf0] %v340
      %347 = vst [vmem:[#allocation1] ss:$2 sm:$0xff] %v152
      %s348 = scalar_lea.vmem [#allocation1], 16
      %349 = vst [vmem:[%s348] ss:$2 sm:$0xff] %v153
      %v350 = vld.sshfl [vmem:[#allocation1] sm:$0xff pattern:$0x75316420]
      %v351 = vld.sshfl [vmem:[#allocation1 + $0x8] sm:$0xff pattern:$0x75316420]
      %v352 = vld.sshfl [vmem:[#allocation1 + $0x10] sm:$0xff pattern:$0x75316420]
      %v353 = vld.sshfl [vmem:[#allocation1 + $0x18] sm:$0xff pattern:$0x75316420]
      %354 = vrot.lane.b32.xlu0 %v350, 90
      %v355 = vpop.permute.xlu0 %354
      %356 = vrot.lane.b32.xlu0 %v351, 90
      %v357 = vpop.permute.xlu0 %356
      %358 = vrot.lane.b32.xlu0 %v352, 90
      %v359 = vpop.permute.xlu0 %358
      %360 = vrot.lane.b32.xlu0 %v353, 90
      %v361 = vpop.permute.xlu0 %360
      %vm362 = vcmask 736256
      %v363 = vsel %vm362, %v355, %v357
      %v364 = vsel %vm362, %v357, %v359
      %v365 = vsel %vm362, %v359, %v361
      %369 = vst [vmem:[#allocation2 + $0xc0] sm:$0xf] %v363
      %370 = vst [vmem:[#allocation2 + $0xc8] sm:$0xf] %v364
      %371 = vst [vmem:[#allocation2 + $0xd0] sm:$0xf] %v365
      %s372 = scalar_lea.vmem %s143, 16
      %v373 = vld [vmem:[%s372] sm:$0xff]
      %v374 = vld [vmem:[%s372 + $0x8] sm:$0xff]
      %377 = vst [vmem:[#allocation1] ss:$2 sm:$0xff] %v373
      %s378 = scalar_lea.vmem [#allocation1], 16
      %379 = vst [vmem:[%s378] ss:$2 sm:$0xff] %v374
      %v380 = vld.sshfl [vmem:[#allocation1] sm:$0xff pattern:$0x75316420]
      %v381 = vld.sshfl [vmem:[#allocation1 + $0x8] sm:$0xff pattern:$0x75316420]
      %v382 = vld.sshfl [vmem:[#allocation1 + $0x10] sm:$0xff pattern:$0x75316420]
      %386 = vst [vmem:[#allocation2 + $0x18] sm:$0xf] %v380
      %387 = vst [vmem:[#allocation2 + $0x20] sm:$0xf] %v381
      %388 = vst [vmem:[#allocation2 + $0x28] sm:$0xf] %v382
      %s389 = scalar_lea.vmem [#allocation1], 1
      %390 = vst [vmem:[%s389] ss:$2 sm:$0xff] %v373
      %s391 = scalar_lea.vmem [#allocation1], 17
      %392 = vst [vmem:[%s391] ss:$2 sm:$0xff] %v374
      %v393 = vld.sshfl [vmem:[#allocation1] sm:$0xff pattern:$0x75316420]
      %v394 = vld.sshfl [vmem:[#allocation1 + $0x8] sm:$0xff pattern:$0x75316420]
      %v395 = vld.sshfl [vmem:[#allocation1 + $0x10] sm:$0xff pattern:$0x75316420]
      %v396 = vld.sshfl [vmem:[#allocation1 + $0x18] sm:$0xff pattern:$0x75316420]
      %397 = vrot.lane.b32.xlu0 %v393, 127
      %v398 = vpop.permute.xlu0 %397
      %399 = vrot.lane.b32.xlu0 %v394, 127
      %v400 = vpop.permute.xlu0 %399
      %401 = vrot.lane.b32.xlu0 %v395, 127
      %v402 = vpop.permute.xlu0 %401
      %403 = vrot.lane.b32.xlu0 %v396, 127
      %v404 = vpop.permute.xlu0 %403
      %v405 = vsel %vm184, %v398, %v400
      %v406 = vsel %vm184, %v400, %v402
      %v407 = vsel %vm184, %v402, %v404
      %411 = vst [vmem:[#allocation2 + $0x18] sm:$0xf0] %v405
      %412 = vst [vmem:[#allocation2 + $0x20] sm:$0xf0] %v406
      %413 = vst [vmem:[#allocation2 + $0x28] sm:$0xf0] %v407
      %414 = vst [vmem:[#allocation1] ss:$2 sm:$0xff] %v373
      %s415 = scalar_lea.vmem [#allocation1], 16
      %416 = vst [vmem:[%s415] ss:$2 sm:$0xff] %v374
      %v417 = vld.sshfl [vmem:[#allocation1] sm:$0xff pattern:$0x75316420]
      %v418 = vld.sshfl [vmem:[#allocation1 + $0x8] sm:$0xff pattern:$0x75316420]
      %v419 = vld.sshfl [vmem:[#allocation1 + $0x10] sm:$0xff pattern:$0x75316420]
      %v420 = vld.sshfl [vmem:[#allocation1 + $0x18] sm:$0xff pattern:$0x75316420]
      %421 = vrot.lane.b32.xlu0 %v417, 126
      %v422 = vpop.permute.xlu0 %421
      %423 = vrot.lane.b32.xlu0 %v418, 126
      %v424 = vpop.permute.xlu0 %423
      %425 = vrot.lane.b32.xlu0 %v419, 126
      %v426 = vpop.permute.xlu0 %425
      %427 = vrot.lane.b32.xlu0 %v420, 126
      %v428 = vpop.permute.xlu0 %427
      %v429 = vsel %vm209, %v422, %v424
      %v430 = vsel %vm209, %v424, %v426
      %v431 = vsel %vm209, %v426, %v428
      %435 = vst [vmem:[#allocation2 + $0x48] sm:$0xf] %v429
      %436 = vst [vmem:[#allocation2 + $0x50] sm:$0xf] %v430
      %437 = vst [vmem:[#allocation2 + $0x58] sm:$0xf] %v431
      %s438 = scalar_lea.vmem [#allocation1], 1
      %439 = vst [vmem:[%s438] ss:$2 sm:$0xff] %v373
      %s440 = scalar_lea.vmem [#allocation1], 17
      %441 = vst [vmem:[%s440] ss:$2 sm:$0xff] %v374
      %v442 = vld.sshfl [vmem:[#allocation1] sm:$0xff pattern:$0x75316420]
      %v443 = vld.sshfl [vmem:[#allocation1 + $0x8] sm:$0xff pattern:$0x75316420]
      %v444 = vld.sshfl [vmem:[#allocation1 + $0x10] sm:$0xff pattern:$0x75316420]
      %v445 = vld.sshfl [vmem:[#allocation1 + $0x18] sm:$0xff pattern:$0x75316420]
      %446 = vrot.lane.b32.xlu0 %v442, 110
      %v447 = vpop.permute.xlu0 %446
      %448 = vrot.lane.b32.xlu0 %v443, 110
      %v449 = vpop.permute.xlu0 %448
      %450 = vrot.lane.b32.xlu0 %v444, 110
      %v451 = vpop.permute.xlu0 %450
      %452 = vrot.lane.b32.xlu0 %v445, 110
      %v453 = vpop.permute.xlu0 %452
      %v454 = vsel %vm235, %v447, %v449
      %v455 = vsel %vm235, %v449, %v451
      %v456 = vsel %vm235, %v451, %v453
      %460 = vst [vmem:[#allocation2 + $0x48] sm:$0xf0] %v454
      %461 = vst [vmem:[#allocation2 + $0x50] sm:$0xf0] %v455
      %462 = vst [vmem:[#allocation2 + $0x58] sm:$0xf0] %v456
      %463 = vst [vmem:[#allocation1] ss:$2 sm:$0xff] %v373
      %s464 = scalar_lea.vmem [#allocation1], 16
      %465 = vst [vmem:[%s464] ss:$2 sm:$0xff] %v374
      %v466 = vld.sshfl [vmem:[#allocation1] sm:$0xff pattern:$0x75316420]
      %v467 = vld.sshfl [vmem:[#allocation1 + $0x8] sm:$0xff pattern:$0x75316420]
      %v468 = vld.sshfl [vmem:[#allocation1 + $0x10] sm:$0xff pattern:$0x75316420]
      %v469 = vld.sshfl [vmem:[#allocation1 + $0x18] sm:$0xff pattern:$0x75316420]
      %470 = vrot.lane.b32.xlu0 %v466, 109
      %v471 = vpop.permute.xlu0 %470
      %472 = vrot.lane.b32.xlu0 %v467, 109
      %v473 = vpop.permute.xlu0 %472
      %474 = vrot.lane.b32.xlu0 %v468, 109
      %v475 = vpop.permute.xlu0 %474
      %476 = vrot.lane.b32.xlu0 %v469, 109
      %v477 = vpop.permute.xlu0 %476
      %v478 = vsel %vm260, %v471, %v473
      %v479 = vsel %vm260, %v473, %v475
      %v480 = vsel %vm260, %v475, %v477
      %484 = vst [vmem:[#allocation2 + $0x78] sm:$0xf] %v478
      %485 = vst [vmem:[#allocation2 + $0x80] sm:$0xf] %v479
      %486 = vst [vmem:[#allocation2 + $0x88] sm:$0xf] %v480
      %s487 = scalar_lea.vmem [#allocation1], 1
      %488 = vst [vmem:[%s487] ss:$2 sm:$0xff] %v373
      %s489 = scalar_lea.vmem [#allocation1], 17
      %490 = vst [vmem:[%s489] ss:$2 sm:$0xff] %v374
      %v491 = vld.sshfl [vmem:[#allocation1] sm:$0xff pattern:$0x75316420]
      %v492 = vld.sshfl [vmem:[#allocation1 + $0x8] sm:$0xff pattern:$0x75316420]
      %v493 = vld.sshfl [vmem:[#allocation1 + $0x10] sm:$0xff pattern:$0x75316420]
      %v494 = vld.sshfl [vmem:[#allocation1 + $0x18] sm:$0xff pattern:$0x75316420]
      %495 = vrot.lane.b32.xlu0 %v491, 108
      %v496 = vpop.permute.xlu0 %495
      %497 = vrot.lane.b32.xlu0 %v492, 108
      %v498 = vpop.permute.xlu0 %497
      %499 = vrot.lane.b32.xlu0 %v493, 108
      %v500 = vpop.permute.xlu0 %499
      %501 = vrot.lane.b32.xlu0 %v494, 108
      %v502 = vpop.permute.xlu0 %501
      %v503 = vsel %vm286, %v496, %v498
      %v504 = vsel %vm286, %v498, %v500
      %v505 = vsel %vm286, %v500, %v502
      %509 = vst [vmem:[#allocation2 + $0x78] sm:$0xf0] %v503
      %510 = vst [vmem:[#allocation2 + $0x80] sm:$0xf0] %v504
      %511 = vst [vmem:[#allocation2 + $0x88] sm:$0xf0] %v505
      %512 = vst [vmem:[#allocation1] ss:$2 sm:$0xff] %v373
      %s513 = scalar_lea.vmem [#allocation1], 16
      %514 = vst [vmem:[%s513] ss:$2 sm:$0xff] %v374
      %v515 = vld.sshfl [vmem:[#allocation1] sm:$0xff pattern:$0x75316420]
      %v516 = vld.sshfl [vmem:[#allocation1 + $0x8] sm:$0xff pattern:$0x75316420]
      %v517 = vld.sshfl [vmem:[#allocation1 + $0x10] sm:$0xff pattern:$0x75316420]
      %v518 = vld.sshfl [vmem:[#allocation1 + $0x18] sm:$0xff pattern:$0x75316420]
      %519 = vrot.lane.b32.xlu0 %v515, 92
      %v520 = vpop.permute.xlu0 %519
      %521 = vrot.lane.b32.xlu0 %v516, 92
      %v522 = vpop.permute.xlu0 %521
      %523 = vrot.lane.b32.xlu0 %v517, 92
      %v524 = vpop.permute.xlu0 %523
      %525 = vrot.lane.b32.xlu0 %v518, 92
      %v526 = vpop.permute.xlu0 %525
      %v527 = vsel %vm311, %v520, %v522
      %v528 = vsel %vm311, %v522, %v524
      %v529 = vsel %vm311, %v524, %v526
      %533 = vst [vmem:[#allocation2 + $0xa8] sm:$0xf] %v527
      %534 = vst [vmem:[#allocation2 + $0xb0] sm:$0xf] %v528
      %535 = vst [vmem:[#allocation2 + $0xb8] sm:$0xf] %v529
      %s536 = scalar_lea.vmem [#allocation1], 1
      %537 = vst [vmem:[%s536] ss:$2 sm:$0xff] %v373
      %s538 = scalar_lea.vmem [#allocation1], 17
      %539 = vst [vmem:[%s538] ss:$2 sm:$0xff] %v374
      %v540 = vld.sshfl [vmem:[#allocation1] sm:$0xff pattern:$0x75316420]
      %v541 = vld.sshfl [vmem:[#allocation1 + $0x8] sm:$0xff pattern:$0x75316420]
      %v542 = vld.sshfl [vmem:[#allocation1 + $0x10] sm:$0xff pattern:$0x75316420]
      %v543 = vld.sshfl [vmem:[#allocation1 + $0x18] sm:$0xff pattern:$0x75316420]
      %544 = vrot.lane.b32.xlu0 %v540, 91
      %v545 = vpop.permute.xlu0 %544
      %546 = vrot.lane.b32.xlu0 %v541, 91
      %v547 = vpop.permute.xlu0 %546
      %548 = vrot.lane.b32.xlu0 %v542, 91
      %v549 = vpop.permute.xlu0 %548
      %550 = vrot.lane.b32.xlu0 %v543, 91
      %v551 = vpop.permute.xlu0 %550
      %v552 = vsel %vm337, %v545, %v547
      %v553 = vsel %vm337, %v547, %v549
      %v554 = vsel %vm337, %v549, %v551
      %558 = vst [vmem:[#allocation2 + $0xa8] sm:$0xf0] %v552
      %559 = vst [vmem:[#allocation2 + $0xb0] sm:$0xf0] %v553
      %560 = vst [vmem:[#allocation2 + $0xb8] sm:$0xf0] %v554
      %561 = vst [vmem:[#allocation1] ss:$2 sm:$0xff] %v373
      %s562 = scalar_lea.vmem [#allocation1], 16
      %563 = vst [vmem:[%s562] ss:$2 sm:$0xff] %v374
      %v564 = vld.sshfl [vmem:[#allocation1] sm:$0xff pattern:$0x75316420]
      %v565 = vld.sshfl [vmem:[#allocation1 + $0x8] sm:$0xff pattern:$0x75316420]
      %v566 = vld.sshfl [vmem:[#allocation1 + $0x10] sm:$0xff pattern:$0x75316420]
      %v567 = vld.sshfl [vmem:[#allocation1 + $0x18] sm:$0xff pattern:$0x75316420]
      %568 = vrot.lane.b32.xlu0 %v564, 90
      %v569 = vpop.permute.xlu0 %568
      %570 = vrot.lane.b32.xlu0 %v565, 90
      %v571 = vpop.permute.xlu0 %570
      %572 = vrot.lane.b32.xlu0 %v566, 90
      %v573 = vpop.permute.xlu0 %572
      %574 = vrot.lane.b32.xlu0 %v567, 90
      %v575 = vpop.permute.xlu0 %574
      %v576 = vsel %vm362, %v569, %v571
      %v577 = vsel %vm362, %v571, %v573
      %v578 = vsel %vm362, %v573, %v575
      %582 = vst [vmem:[#allocation2 + $0xd8] sm:$0xf] %v576
      %583 = vst [vmem:[#allocation2 + $0xe0] sm:$0xf] %v577
      %584 = vst [vmem:[#allocation2 + $0xe8] sm:$0xf] %v578
      %v585 = vld [vmem:[%s1] sm:$0xff]
      %v586 = vld [vmem:[%s1 + $0x8] sm:$0xff]
      %v587 = vld [vmem:[#allocation2] sm:$0xff]
      %v588 = vld [vmem:[#allocation2 + $0x8] sm:$0xff]
      %v589 = vld [vmem:[#allocation2 + $0x10] sm:$0xff]
      %v590 = vld [vmem:[#allocation2 + $0x18] sm:$0xff]
      %v591 = vld [vmem:[#allocation2 + $0x20] sm:$0xff]
      %v592 = vld [vmem:[#allocation2 + $0x28] sm:$0xff]
      %v593 = vld [vmem:[#allocation2 + $0x30] sm:$0xff]
      %v594 = vld [vmem:[#allocation2 + $0x38] sm:$0xff]
      %v595 = vld [vmem:[#allocation2 + $0x40] sm:$0xff]
      %v596 = vld [vmem:[#allocation2 + $0x48] sm:$0xff]
      %v597 = vld [vmem:[#allocation2 + $0x50] sm:$0xff]
      %v598 = vld [vmem:[#allocation2 + $0x58] sm:$0xff]
      %v599 = vld [vmem:[#allocation2 + $0x60] sm:$0xff]
      %v600 = vld [vmem:[#allocation2 + $0x68] sm:$0xff]
      %v601 = vld [vmem:[#allocation2 + $0x70] sm:$0xff]
      %v602 = vld [vmem:[#allocation2 + $0x78] sm:$0xff]
      %v603 = vld [vmem:[#allocation2 + $0x80] sm:$0xff]
      %v604 = vld [vmem:[#allocation2 + $0x88] sm:$0xff]
      %v605 = vld [vmem:[#allocation2 + $0x90] sm:$0xff]
      %v606 = vld [vmem:[#allocation2 + $0x98] sm:$0xff]
      %v607 = vld [vmem:[#allocation2 + $0xa0] sm:$0xff]
      %v608 = vld [vmem:[#allocation2 + $0xa8] sm:$0xff]
      %v609 = vld [vmem:[#allocation2 + $0xb0] sm:$0xff]
      %v610 = vld [vmem:[#allocation2 + $0xb8] sm:$0xff]
      %v611 = vld [vmem:[#allocation2 + $0xc0] sm:$0xf]
      %v612 = vld [vmem:[#allocation2 + $0xc8] sm:$0xf]
      %v613 = vld [vmem:[#allocation2 + $0xd0] sm:$0xf]
      %v614 = vld [vmem:[#allocation2 + $0xd8] sm:$0xf]
      %v615 = vld [vmem:[#allocation2 + $0xe0] sm:$0xf]
      %v616 = vld [vmem:[#allocation2 + $0xe8] sm:$0xf]
      %vm617 = vcmask 293888
      %v619 = vsel %vm617, %v585, 0
      %v622 = vsel %vm617, %v586, 0
      %vm624 = vcmask 1043456
      %v626 = vsel %vm624, %v611, 0
      %v629 = vsel %vm624, %v612, 0
      %v632 = vsel %vm624, %v613, 0
      %v635 = vsel %vm624, %v614, 0
      %v638 = vsel %vm624, %v615, 0
      %v641 = vsel %vm624, %v616, 0
      %643 = vmatpush.msra.mxu0 0.0
      %644 = vmatpush.msra.mxu0 0.0
      %645 = vmatpush.msra.mxu0 0.0
      %646 = vmatpush.msra.mxu0 0.0
      %647 = vmatpush.msra.mxu0 0.0
      %648 = vmatpush.msra.mxu0 0.0
      %649 = vmatpush.msra.mxu0 0.0
      %650 = vmatpush.msra.mxu0 0.0
      %651 = vmatpush.msra.mxu0 0.0
      %652 = vmatpush.msra.mxu0 0.0
      %653 = vmatpush.msra.mxu0 0.0
      %654 = vmatpush.msra.mxu0 %v626
      %655 = vmatpush.msra.mxu0 %v605
      %656 = vmatpush.msra.mxu0 %v599
      %657 = vmatpush.msra.mxu0 %v593
      %658 = vmatpush.msra.mxu0 %v587
      %659 = vmatmul.f32.gmra.mxu0 %v619
      %v660 = vpop.f32.mrf.mxu0
      %v661 = vadd.f32 0.0, %v660
      %662 = vmatmul.f32.gmra.mxu0 %v622
      %v663 = vpop.f32.mrf.mxu0
      %v664 = vadd.f32 0.0, %v663
      %665 = vdwg.mxu0
      %666 = vmatpush.msra.mxu0 0.0
      %667 = vmatpush.msra.mxu0 0.0
      %668 = vmatpush.msra.mxu0 0.0
      %669 = vmatpush.msra.mxu0 0.0
      %670 = vmatpush.msra.mxu0 0.0
      %671 = vmatpush.msra.mxu0 0.0
      %672 = vmatpush.msra.mxu0 0.0
      %673 = vmatpush.msra.mxu0 0.0
      %674 = vmatpush.msra.mxu0 0.0
      %675 = vmatpush.msra.mxu0 0.0
      %676 = vmatpush.msra.mxu0 0.0
      %677 = vmatpush.msra.mxu0 %v629
      %678 = vmatpush.msra.mxu0 %v606
      %679 = vmatpush.msra.mxu0 %v600
      %680 = vmatpush.msra.mxu0 %v594
      %681 = vmatpush.msra.mxu0 %v588
      %682 = vmatmul.f32.gmra.mxu0 %v619
      %v683 = vpop.f32.mrf.mxu0
      %v684 = vadd.f32 0.0, %v683
      %685 = vmatmul.f32.gmra.mxu0 %v622
      %v686 = vpop.f32.mrf.mxu0
      %v687 = vadd.f32 0.0, %v686
      %688 = vdwg.mxu0
      %689 = vmatpush.msra.mxu0 0.0
      %690 = vmatpush.msra.mxu0 0.0
      %691 = vmatpush.msra.mxu0 0.0
      %692 = vmatpush.msra.mxu0 0.0
      %693 = vmatpush.msra.mxu0 0.0
      %694 = vmatpush.msra.mxu0 0.0
      %695 = vmatpush.msra.mxu0 0.0
      %696 = vmatpush.msra.mxu0 0.0
      %697 = vmatpush.msra.mxu0 0.0
      %698 = vmatpush.msra.mxu0 0.0
      %699 = vmatpush.msra.mxu0 0.0
      %700 = vmatpush.msra.mxu0 %v632
      %701 = vmatpush.msra.mxu0 %v607
      %702 = vmatpush.msra.mxu0 %v601
      %703 = vmatpush.msra.mxu0 %v595
      %704 = vmatpush.msra.mxu0 %v589
      %705 = vmatmul.f32.gmra.mxu0 %v619
      %v706 = vpop.f32.mrf.mxu0
      %v707 = vadd.f32 0.0, %v706
      %708 = vmatmul.f32.gmra.mxu0 %v622
      %v709 = vpop.f32.mrf.mxu0
      %v710 = vadd.f32 0.0, %v709
      %711 = vdwg.mxu0
      %712 = vmatpush.msra.mxu0 0.0
      %713 = vmatpush.msra.mxu0 0.0
      %714 = vmatpush.msra.mxu0 0.0
      %715 = vmatpush.msra.mxu0 0.0
      %716 = vmatpush.msra.mxu0 0.0
      %717 = vmatpush.msra.mxu0 0.0
      %718 = vmatpush.msra.mxu0 0.0
      %719 = vmatpush.msra.mxu0 0.0
      %720 = vmatpush.msra.mxu0 0.0
      %721 = vmatpush.msra.mxu0 0.0
      %722 = vmatpush.msra.mxu0 0.0
      %723 = vmatpush.msra.mxu0 %v635
      %724 = vmatpush.msra.mxu0 %v608
      %725 = vmatpush.msra.mxu0 %v602
      %726 = vmatpush.msra.mxu0 %v596
      %727 = vmatpush.msra.mxu0 %v590
      %728 = vmatmul.f32.gmra.mxu0 %v619
      %v729 = vpop.f32.mrf.mxu0
      %v730 = vadd.f32 0.0, %v729
      %731 = vmatmul.f32.gmra.mxu0 %v622
      %v732 = vpop.f32.mrf.mxu0
      %v733 = vadd.f32 0.0, %v732
      %734 = vdwg.mxu0
      %735 = vmatpush.msra.mxu0 0.0
      %736 = vmatpush.msra.mxu0 0.0
      %737 = vmatpush.msra.mxu0 0.0
      %738 = vmatpush.msra.mxu0 0.0
      %739 = vmatpush.msra.mxu0 0.0
      %740 = vmatpush.msra.mxu0 0.0
      %741 = vmatpush.msra.mxu0 0.0
      %742 = vmatpush.msra.mxu0 0.0
      %743 = vmatpush.msra.mxu0 0.0
      %744 = vmatpush.msra.mxu0 0.0
      %745 = vmatpush.msra.mxu0 0.0
      %746 = vmatpush.msra.mxu0 %v638
      %747 = vmatpush.msra.mxu0 %v609
      %748 = vmatpush.msra.mxu0 %v603
      %749 = vmatpush.msra.mxu0 %v597
      %750 = vmatpush.msra.mxu0 %v591
      %751 = vmatmul.f32.gmra.mxu0 %v619
      %v752 = vpop.f32.mrf.mxu0
      %v753 = vadd.f32 0.0, %v752
      %754 = vmatmul.f32.gmra.mxu0 %v622
      %v755 = vpop.f32.mrf.mxu0
      %v756 = vadd.f32 0.0, %v755
      %757 = vdwg.mxu0
      %758 = vmatpush.msra.mxu0 0.0
      %759 = vmatpush.msra.mxu0 0.0
      %760 = vmatpush.msra.mxu0 0.0
      %761 = vmatpush.msra.mxu0 0.0
      %762 = vmatpush.msra.mxu0 0.0
      %763 = vmatpush.msra.mxu0 0.0
      %764 = vmatpush.msra.mxu0 0.0
      %765 = vmatpush.msra.mxu0 0.0
      %766 = vmatpush.msra.mxu0 0.0
      %767 = vmatpush.msra.mxu0 0.0
      %768 = vmatpush.msra.mxu0 0.0
      %769 = vmatpush.msra.mxu0 %v641
      %770 = vmatpush.msra.mxu0 %v610
      %771 = vmatpush.msra.mxu0 %v604
      %772 = vmatpush.msra.mxu0 %v598
      %773 = vmatpush.msra.mxu0 %v592
      %774 = vmatmul.f32.gmra.mxu0 %v619
      %v775 = vpop.f32.mrf.mxu0
      %v776 = vadd.f32 0.0, %v775
      %777 = vmatmul.f32.gmra.mxu0 %v622
      %v778 = vpop.f32.mrf.mxu0
      %v779 = vadd.f32 0.0, %v778
      %780 = vdwg.mxu0
      %781 = vst [vmem:[%s150] sm:$0xff] %v661
      %782 = vst [vmem:[%s150 + $0x8] sm:$0xff] %v684
      %783 = vst [vmem:[%s150 + $0x10] sm:$0xff] %v707
      %784 = vst [vmem:[%s150 + $0x18] sm:$0xff] %v664
      %785 = vst [vmem:[%s150 + $0x20] sm:$0xff] %v687
      %786 = vst [vmem:[%s150 + $0x28] sm:$0xff] %v710
      %s787 = scalar_lea.vmem %s150, 48
      %788 = vst [vmem:[%s787] sm:$0xff] %v730
      %789 = vst [vmem:[%s787 + $0x8] sm:$0xff] %v753
      %790 = vst [vmem:[%s787 + $0x10] sm:$0xff] %v776
      %791 = vst [vmem:[%s787 + $0x18] sm:$0xff] %v733
      %792 = vst [vmem:[%s787 + $0x20] sm:$0xff] %v756
      %793 = vst [vmem:[%s787 + $0x28] sm:$0xff] %v779
      %s794 = smul.u32 2, %s13
      %p795 = scmp.lt.s32.totalorder %s794, 3
      %s796 = scalar_select %p795, %s794, 3
      %s797 = smul.addr %s796, 6
      %s798 = smul.addr %s797, 8
      %s799 = scalar_lea.vmem %s2, %s798
      // Predicated region
      $region29: #{_unnamed_function_.1} parent=27 // pred_check
        %p800 = pneg %p78
      $region30: #{_unnamed_function_.1} parent=27 // pred_check_branch
        %802 = sbr.rel (%p800) target = $region32
      $region31: #{_unnamed_function_.1} parent=27 // pred_region
        %s803 = smul.u32 2, %s13
      $region32: #{_unnamed_function_.1} parent=27 // pred_fallthru
        _
    $region28: #{_unnamed_function_.1} parent=5 // pred_fallthru
      _
    %p804 = scmp.le.s32.totalorder 2, %s8
    // Predicated region
    $region33: #{_unnamed_function_.1} parent=5 // pred_check
      %p805 = pneg %p804
    $region34: #{_unnamed_function_.1} parent=5 // pred_check_branch
      %807 = sbr.rel (%p805) target = $region36
    $region35: #{_unnamed_function_.1} parent=5 // pred_region
      %s808 = ssub.s32 %s8, 2
      // Predicated region
      $region37: #{_unnamed_function_.1} parent=35 // pred_check
        %p809 = pneg %p84
      $region38: #{_unnamed_function_.1} parent=35 // pred_check_branch
        %811 = sbr.rel (%p809) target = $region40
      $region39: #{_unnamed_function_.1} parent=35 // pred_region
        %s812 = smul.u32 2, %s14
        %p813 = scmp.lt.s32.totalorder %s812, 3
        %s814 = scalar_select %p813, %s812, 3
        %s815 = smul.addr %s814, 6
        %s816 = smul.addr %s815, 8
        %s817 = scalar_lea.vmem %s2, %s816
      $region40: #{_unnamed_function_.1} parent=35 // pred_fallthru
        _
    $region36: #{_unnamed_function_.1} parent=5 // pred_fallthru
      _
  $region6: #{_unnamed_function_.1} parent=0 // loop_footer
    %s12 = sadd.s32 1, %s8
  $region7: #{_unnamed_function_.1} parent=0 // loop_footer_branch
    %7 = sbr.rel target = $region3
  $region8: #{_unnamed_function_.1} parent=0 // loop_exit
    _

</llo_original>
